<compile_context>
chip_gen: v6e
topology: v6e:2x2x1
jax: 0.10.0
libtpu: 0.0.40
codegen_flags: <defaults>
</compile_context>

<pallas_src>
import functools
import math

import jax
import jax.numpy as jnp
from jax.experimental import pallas as pl
from jax.experimental.pallas import tpu as pltpu

_LANE = 128
_SUBLANE = 8


def _round_up(v, m):
    return (v + m - 1) // m * m


# ---------------------------------------------------------------------------
# Kernel
# ---------------------------------------------------------------------------
def gru_cell_kernel(x_ref, h_ref, wx_ref, wh_ref, brz_ref, bhn_ref, out_ref, *, hp):
    """One batch tile.

    x_ref:   (tb, I)     input activations (bf16 fast path / f32 exact path)
    h_ref:   (tb, Hp)    previous hidden state (same dtype as x_ref)
    wx_ref:  (I,  3*Hp)  [W_ir | W_iz | W_in]^T
    wh_ref:  (Hp, 3*Hp)  [W_hr | W_hz | W_hn]^T
    brz_ref: (1,  3*Hp)  [b_ir+b_hr | b_iz+b_hz | b_in]   (f32)
    bhn_ref: (1,  Hp)    b_hn                             (f32)
    """
    x = x_ref[...]
    h = h_ref[...]

    # Two fused MXU matmuls with f32 accumulation.
    gx = jnp.dot(x, wx_ref[...], preferred_element_type=jnp.float32) + brz_ref[...]
    gh = jnp.dot(h, wh_ref[...], preferred_element_type=jnp.float32)

    # Gate order along the 3*Hp axis: r, z, n (all slices are 128-lane aligned).
    r = jax.nn.sigmoid(gx[:, 0:hp] + gh[:, 0:hp])
    z = jax.nn.sigmoid(gx[:, hp:2 * hp] + gh[:, hp:2 * hp])
    n = jnp.tanh(gx[:, 2 * hp:3 * hp] + r * (gh[:, 2 * hp:3 * hp] + bhn_ref[...]))

    hf = h.astype(jnp.float32)
    # h' = (1 - z) * n + z * h  ==  n + z * (h - n)   (one fewer multiply)
    out_ref[...] = (n + z * (hf - n)).astype(out_ref.dtype)


# ---------------------------------------------------------------------------
# Parameter packing (done ONCE at init, not per forward call)
# ---------------------------------------------------------------------------
def pack_params(params, *, mxu_dtype=jnp.bfloat16):
    """Pack torch-convention GRU params into fused, transposed, padded tensors.

    Gate order along 3H is r, z, n; the hidden dim is padded to a 128-lane
    multiple so gate slices and the output block are lane-dense.
    b_ir+b_hr and b_iz+b_hz are pre-added (valid because r/z add the two
    projections directly); b_hn stays separate because it is scaled by r.
    bf16 is the production default (f32 accumulation in-kernel); pass
    mxu_dtype=jnp.float32 for a test-only exact path.
    """
    H, I = params["w_wir"].shape             # torch Linear layout: (out, in)
    Hp = _round_up(H, _LANE)

    def wt(name):                             # (H, fan_in) -> (fan_in, Hp)
        return jnp.pad(params[name].T, ((0, 0), (0, Hp - H)))

    def bp(name):                             # (H,) -> (1, Hp)
        return jnp.pad(params[name], (0, Hp - H)).reshape(1, Hp)

    wx = jnp.concatenate([wt("w_wir"), wt("w_wiz"), wt("w_win")], axis=1)
    wh = jnp.concatenate([wt("w_whr"), wt("w_whz"), wt("w_whn")], axis=1)
    wh = jnp.pad(wh, ((0, Hp - H), (0, 0)))   # contraction dim matches padded h

    brz = jnp.concatenate(
        [bp("b_wir") + bp("b_whr"), bp("b_wiz") + bp("b_whz"), bp("b_win")], axis=1)
    bhn = bp("b_whn")

    return {
        "wx": wx.astype(mxu_dtype),           # (I,  3*Hp)
        "wh": wh.astype(mxu_dtype),           # (Hp, 3*Hp)
        "brz": brz.astype(jnp.float32),       # (1,  3*Hp)
        "bhn": bhn.astype(jnp.float32),       # (1,  Hp)
        "H": H, "Hp": Hp, "I": I,
    }


# ---------------------------------------------------------------------------
# Wrapper
# ---------------------------------------------------------------------------
def _choose_tile(B, Hp):
    """Pick (tb, Bp): large MXU-friendly batch tiles; >=2 tiles whenever the
    batch allows so the "parallel" axis can shard across v7x's two TCs."""
    Bp8 = _round_up(max(B, 1), _SUBLANE)
    # Cap tb so the f32 gx/gh intermediates (tb*3*Hp*4 B each) stay within a
    # few MiB of VMEM headroom at large hidden sizes.
    tb_cap = 256 if Hp <= 2048 else 128
    if Bp8 <= 2 * _SUBLANE:
        return Bp8, Bp8                       # tiny batch: single tile
    tb = min(tb_cap, _round_up(pl.cdiv(Bp8, 2), _SUBLANE))
    return tb, _round_up(Bp8, tb)


def _vmem_limit(vmem_est):
    """Generation-aware scoped-VMEM limit: headroom over the estimate, capped
    at 75% of physical VMEM (64 MiB on v7x, 128 MiB on v5e/v6e)."""
    try:
        cap = int(pltpu.get_tpu_info().vmem_capacity_bytes * 3 // 4)
    except Exception:                          # conservative fallback fits v7x
        cap = 48 * 1024 * 1024
    return min(max(int(vmem_est * 3 // 2), 32 * 1024 * 1024), cap)


def gru_cell_pallas(x, h, packed, *, tb=None):
    """x: (B, I), h: (B, H); packed: output of pack_params(). Returns (B, H)."""
    B, I = x.shape
    H, Hp = packed["H"], packed["Hp"]
    assert I == packed["I"] and h.shape == (B, H)

    wx, wh, brz, bhn = packed["wx"], packed["wh"], packed["brz"], packed["bhn"]
    act_dt = wx.dtype                          # bf16 path DMAs activations as bf16

    if tb is None:
        tb, Bp = _choose_tile(B, Hp)
    else:
        assert tb % _SUBLANE == 0
        Bp = _round_up(B, tb)
    grid = (Bp // tb,)

    # Pad / cast at the boundary; skipped entirely when already aligned.
    xp = x.astype(act_dt) if x.dtype != act_dt else x
    hin = h.astype(act_dt) if h.dtype != act_dt else h
    if Bp != B:
        xp = jnp.pad(xp, ((0, Bp - B), (0, 0)))
    if Bp != B or Hp != H:
        hin = jnp.pad(hin, ((0, Bp - B), (0, Hp - H)))

    w_isz = jnp.dtype(wx.dtype).itemsize
    a_isz = jnp.dtype(act_dt).itemsize
    o_isz = jnp.dtype(x.dtype).itemsize
    flops = 2 * Bp * (I + Hp) * 3 * Hp + 10 * Bp * Hp
    bytes_accessed = ((wx.size + wh.size) * w_isz + (brz.size + bhn.size) * 4
                      + (xp.size + hin.size) * a_isz + Bp * Hp * o_isz)
    cost = pl.CostEstimate(flops=int(flops),
                           transcendentals=int(3 * Bp * Hp),
                           bytes_accessed=int(bytes_accessed))

    # Weights/biases: constant index_map (fetched once, VMEM-resident across
    # the batch grid) and single-buffered so they don't pay a double-buffer
    # VMEM tax.  Activation tiles stay auto double-buffered.
    def resident(shape):
        idx = lambda i: (0,) * len(shape)
        try:
            return pl.BlockSpec(shape, idx, pipeline_mode=pl.Buffered(1))
        except (TypeError, AttributeError):
            return pl.BlockSpec(shape, idx)

    # VMEM estimate: single-buffered weights + double-buffered activation/out
    # tiles + in-kernel f32 intermediates (gx, gh, gates).
    vmem_est = ((wx.size + wh.size) * w_isz + (brz.size + bhn.size) * 4
                + 2 * tb * (I + Hp) * a_isz + 2 * tb * Hp * o_isz
                + 2 * tb * 3 * Hp * 4 + 4 * tb * Hp * 4)
    cp_kwargs = dict(dimension_semantics=("parallel",))
    if vmem_est > 12 * 1024 * 1024:            # below v5e's 16 MiB default
        cp_kwargs["vmem_limit_bytes"] = _vmem_limit(vmem_est)
    # TODO(synk): for hidden sizes where the fused (I+Hp, 3*Hp) weights exceed
    # VMEM (notably v7x's 64 MiB), add a lane-block grid axis over Hp with
    # gate-major packed weights so the weights stream instead of staying resident.
    # TODO(synk): when this cell drives a sequence, add a timestep grid axis
    # with h carried in VMEM scratch so weights are fetched once per sequence.

    out = pl.pallas_call(
        functools.partial(gru_cell_kernel, hp=Hp),
        out_shape=jax.ShapeDtypeStruct((Bp, Hp), x.dtype),
        grid=grid,
        in_specs=[
            pl.BlockSpec((tb, I), lambda i: (i, 0)),     # x tile
            pl.BlockSpec((tb, Hp), lambda i: (i, 0)),    # h tile
            resident((I, 3 * Hp)),                       # W_x
            resident((Hp, 3 * Hp)),                      # W_h
            resident((1, 3 * Hp)),                       # fused r/z biases + b_in
            resident((1, Hp)),                           # b_hn
        ],
        out_specs=pl.BlockSpec((tb, Hp), lambda i: (i, 0)),
        compiler_params=pltpu.CompilerParams(**cp_kwargs),
        cost_estimate=cost,
    )(xp, hin, wx, wh, brz, bhn)

    if Bp != B or Hp != H:
        out = out[:B, :H]
    return out


# ---------------------------------------------------------------------------
# Init + pure-JAX reference (mirrors the PyTorch module)
# ---------------------------------------------------------------------------
def init_params(key, input_size, hidden_size):
    """Deterministic init matching torch.nn.Linear default (uniform +/-1/sqrt(fan_in))."""
    params = {}
    names_fanin = [
        ("wir", input_size), ("whr", hidden_size),
        ("wiz", input_size), ("whz", hidden_size),
        ("win", input_size), ("whn", hidden_size),
    ]
    keys = jax.random.split(key, 2 * len(names_fanin))
    for i, (name, fan_in) in enumerate(names_fanin):
        bound = 1.0 / math.sqrt(fan_in)
        params[f"w_{name}"] = jax.random.uniform(
            keys[2 * i], (hidden_size, fan_in), jnp.float32, -bound, bound)
        params[f"b_{name}"] = jax.random.uniform(
            keys[2 * i + 1], (hidden_size,), jnp.float32, -bound, bound)
    return params


def gru_cell_ref(x, h, params):
    """Pure-JAX reference mirroring the PyTorch forward."""
    def lin(v, wname, bname):
        return v @ params[wname].T + params[bname]

    r = jax.nn.sigmoid(lin(x, "w_wir", "b_wir") + lin(h, "w_whr", "b_whr"))
    z = jax.nn.sigmoid(lin(x, "w_wiz", "b_wiz") + lin(h, "w_whz", "b_whz"))
    n = jnp.tanh(lin(x, "w_win", "b_win") + r * lin(h, "w_whn", "b_whn"))
    return (1.0 - z) * n + z * h


if __name__ == "__main__":
    INPUT_SIZE, HIDDEN_SIZE = 16, 32

    key = jax.random.PRNGKey(0)
    k_params, k_x, k_h, k_x2, k_h2 = jax.random.split(key, 5)
    params = init_params(k_params, INPUT_SIZE, HIDDEN_SIZE)

    # --- forward(inputs) with hidden=False -> hidden initialized to zeros ----
    B = 16
    x = jax.random.normal(k_x, (B, INPUT_SIZE), jnp.float32)
    h0 = jnp.zeros((B, HIDDEN_SIZE), jnp.float32)
    ref0 = gru_cell_ref(x, h0, params)

    # Exact-precision (test-only) path: f32 MXU operands.
    packed_f32 = pack_params(params, mxu_dtype=jnp.float32)
    out0 = jax.block_until_ready(gru_cell_pallas(x, h0, packed_f32))
    assert out0.shape == (B, HIDDEN_SIZE)
    assert jnp.allclose(out0, ref0, atol=1e-5, rtol=1e-5), (
        f"f32 path max abs err {jnp.max(jnp.abs(out0 - ref0))}")

    # Non-zero hidden state.
    h1 = jax.random.normal(k_h, (B, HIDDEN_SIZE), jnp.float32)
    ref1 = gru_cell_ref(x, h1, params)
    out1 = jax.block_until_ready(gru_cell_pallas(x, h1, packed_f32))
    assert jnp.allclose(out1, ref1, atol=1e-5, rtol=1e-5), (
        f"f32 path (h!=0) max abs err {jnp.max(jnp.abs(out1 - ref1))}")

    # Production path: bf16 MXU operands + bf16 activation DMA, f32 gate math.
    packed_bf16 = pack_params(params)          # default mxu_dtype=bf16
    out_bf16 = jax.block_until_ready(gru_cell_pallas(x, h1, packed_bf16))
    assert jnp.allclose(out_bf16, ref1, atol=2e-2, rtol=2e-2), (
        f"bf16 path max abs err {jnp.max(jnp.abs(out_bf16 - ref1))}")

    # Larger, unaligned batch exercising the multi-tile grid (grid > 1).
    B2 = 40
    x2 = jax.random.normal(k_x2, (B2, INPUT_SIZE), jnp.float32)
    h2 = jax.random.normal(k_h2, (B2, HIDDEN_SIZE), jnp.float32)
    ref2 = gru_cell_ref(x2, h2, params)
    out2 = jax.block_until_ready(gru_cell_pallas(x2, h2, packed_f32))
    assert out2.shape == (B2, HIDDEN_SIZE)
    assert jnp.allclose(out2, ref2, atol=1e-5, rtol=1e-5), (
        f"f32 multi-tile path max abs err {jnp.max(jnp.abs(out2 - ref2))}")

    print("KERNEL_OK")
</pallas_src>

<mosaic_0001>
module attributes {stable_mosaic.version = 11 : i64} {
  func.func @gru_cell_kernel(%arg0: i32, %arg1: memref<16x16xf32, #tpu.memory_space<vmem>>, %arg2: memref<16x128xf32, #tpu.memory_space<vmem>>, %arg3: memref<16x384xf32, #tpu.memory_space<vmem>>, %arg4: memref<128x384xf32, #tpu.memory_space<vmem>>, %arg5: memref<1x384xf32, #tpu.memory_space<vmem>>, %arg6: memref<1x128xf32, #tpu.memory_space<vmem>>, %arg7: memref<16x128xf32, #tpu.memory_space<vmem>>) attributes {dimension_semantics = [#tpu.dimension_semantics<parallel>], iteration_bounds = array<i64: 1>, scalar_prefetch = 0 : i64, scratch_operands = 0 : i64, tpu.core_type = #tpu.core_type<tc>, window_params = [{transform_indices = @transform_0, window_bounds = array<i64: 16, 16>}, {transform_indices = @transform_1, window_bounds = array<i64: 16, 128>}, {pipeline_mode = #tpu.pipeline_mode<synchronous>, transform_indices = @transform_2, window_bounds = array<i64: 16, 384>}, {pipeline_mode = #tpu.pipeline_mode<synchronous>, transform_indices = @transform_3, window_bounds = array<i64: 128, 384>}, {pipeline_mode = #tpu.pipeline_mode<synchronous>, transform_indices = @transform_4, window_bounds = array<i64: 1, 384>}, {pipeline_mode = #tpu.pipeline_mode<synchronous>, transform_indices = @transform_5, window_bounds = array<i64: 1, 128>}, {transform_indices = @transform_6, window_bounds = array<i64: 16, 128>}]} {
    %c0 = arith.constant 0 : index
    %c0_0 = arith.constant 0 : index
    %0 = vector.load %arg1[%c0, %c0_0] : memref<16x16xf32, #tpu.memory_space<vmem>>, vector<16x16xf32>
    %c0_1 = arith.constant 0 : index
    %c0_2 = arith.constant 0 : index
    %1 = vector.load %arg2[%c0_1, %c0_2] : memref<16x128xf32, #tpu.memory_space<vmem>>, vector<16x128xf32>
    %c0_3 = arith.constant 0 : index
    %c0_4 = arith.constant 0 : index
    %2 = vector.load %arg3[%c0_3, %c0_4] : memref<16x384xf32, #tpu.memory_space<vmem>>, vector<16x384xf32>
    %cst = arith.constant dense<0.000000e+00> : vector<16x384xf32>
    %3 = tpu.matmul %0, %2, %cst {dimension_numbers = #tpu.dot_dimension_numbers<[1], [0], [0], [1], [0, 0, 1, 1], [], []>} : vector<16x16xf32>, vector<16x384xf32>, vector<16x384xf32> -> vector<16x384xf32>
    %c0_5 = arith.constant 0 : index
    %c0_6 = arith.constant 0 : index
    %4 = vector.load %arg5[%c0_5, %c0_6] : memref<1x384xf32, #tpu.memory_space<vmem>>, vector<1x384xf32>
    %5 = vector.broadcast %4 : vector<1x384xf32> to vector<16x384xf32>
    %6 = arith.addf %3, %5 : vector<16x384xf32>
    %c0_7 = arith.constant 0 : index
    %c0_8 = arith.constant 0 : index
    %7 = vector.load %arg4[%c0_7, %c0_8] : memref<128x384xf32, #tpu.memory_space<vmem>>, vector<128x384xf32>
    %cst_9 = arith.constant dense<0.000000e+00> : vector<16x384xf32>
    %8 = tpu.matmul %1, %7, %cst_9 {dimension_numbers = #tpu.dot_dimension_numbers<[1], [0], [0], [1], [0, 0, 1, 1], [], []>} : vector<16x128xf32>, vector<128x384xf32>, vector<16x384xf32> -> vector<16x384xf32>
    %9 = vector.extract_strided_slice %6 {offsets = [0, 0], sizes = [16, 128], strides = [1, 1]} : vector<16x384xf32> to vector<16x128xf32>
    %10 = vector.extract_strided_slice %8 {offsets = [0, 0], sizes = [16, 128], strides = [1, 1]} : vector<16x384xf32> to vector<16x128xf32>
    %11 = arith.addf %9, %10 : vector<16x128xf32>
    %12 = arith.negf %11 : vector<16x128xf32>
    %13 = math.exp %12 : vector<16x128xf32>
    %cst_10 = arith.constant 1.000000e+00 : f32
    %14 = vector.broadcast %cst_10 : f32 to vector<16x128xf32>
    %15 = arith.addf %14, %13 : vector<16x128xf32>
    %16 = arith.divf %14, %15 : vector<16x128xf32>
    %17 = vector.extract_strided_slice %6 {offsets = [0, 128], sizes = [16, 128], strides = [1, 1]} : vector<16x384xf32> to vector<16x128xf32>
    %18 = vector.extract_strided_slice %8 {offsets = [0, 128], sizes = [16, 128], strides = [1, 1]} : vector<16x384xf32> to vector<16x128xf32>
    %19 = arith.addf %17, %18 : vector<16x128xf32>
    %20 = arith.negf %19 : vector<16x128xf32>
    %21 = math.exp %20 : vector<16x128xf32>
    %cst_11 = arith.constant 1.000000e+00 : f32
    %22 = vector.broadcast %cst_11 : f32 to vector<16x128xf32>
    %23 = arith.addf %22, %21 : vector<16x128xf32>
    %24 = arith.divf %22, %23 : vector<16x128xf32>
    %25 = vector.extract_strided_slice %6 {offsets = [0, 256], sizes = [16, 128], strides = [1, 1]} : vector<16x384xf32> to vector<16x128xf32>
    %26 = vector.extract_strided_slice %8 {offsets = [0, 256], sizes = [16, 128], strides = [1, 1]} : vector<16x384xf32> to vector<16x128xf32>
    %c0_12 = arith.constant 0 : index
    %c0_13 = arith.constant 0 : index
    %27 = vector.load %arg6[%c0_12, %c0_13] : memref<1x128xf32, #tpu.memory_space<vmem>>, vector<1x128xf32>
    %28 = vector.broadcast %27 : vector<1x128xf32> to vector<16x128xf32>
    %29 = arith.addf %26, %28 : vector<16x128xf32>
    %30 = arith.mulf %16, %29 : vector<16x128xf32>
    %31 = arith.addf %25, %30 : vector<16x128xf32>
    %32 = math.tanh %31 : vector<16x128xf32>
    %33 = arith.subf %1, %32 : vector<16x128xf32>
    %34 = arith.mulf %24, %33 : vector<16x128xf32>
    %35 = arith.addf %32, %34 : vector<16x128xf32>
    %c0_14 = arith.constant 0 : index
    %c0_15 = arith.constant 0 : index
    %36 = vector.load %arg7[%c0_14, %c0_15] : memref<16x128xf32, #tpu.memory_space<vmem>>, vector<16x128xf32>
    tpu.vector_store %arg7[%c0_14, %c0_15], %35 {strides = array<i32>} : memref<16x128xf32, #tpu.memory_space<vmem>>, vector<16x128xf32>,
    return
  }
  func.func @transform_0(%arg0: i32) -> (i32, i32) {
    %c0_i32 = arith.constant 0 : i32
    %c0_i32_0 = arith.constant 0 : i32
    return %arg0, %c0_i32 : i32, i32
  }
  func.func @transform_1(%arg0: i32) -> (i32, i32) {
    %c0_i32 = arith.constant 0 : i32
    %c0_i32_0 = arith.constant 0 : i32
    return %arg0, %c0_i32 : i32, i32
  }
  func.func @transform_2(%arg0: i32) -> (i32, i32) {
    %c0_i32 = arith.constant 0 : i32
    %c0_i32_0 = arith.constant 0 : i32
    %c0_i32_1 = arith.constant 0 : i32
    return %c0_i32, %c0_i32_0 : i32, i32
  }
  func.func @transform_3(%arg0: i32) -> (i32, i32) {
    %c0_i32 = arith.constant 0 : i32
    %c0_i32_0 = arith.constant 0 : i32
    %c0_i32_1 = arith.constant 0 : i32
    return %c0_i32, %c0_i32_0 : i32, i32
  }
  func.func @transform_4(%arg0: i32) -> (i32, i32) {
    %c0_i32 = arith.constant 0 : i32
    %c0_i32_0 = arith.constant 0 : i32
    %c0_i32_1 = arith.constant 0 : i32
    return %c0_i32, %c0_i32_0 : i32, i32
  }
  func.func @transform_5(%arg0: i32) -> (i32, i32) {
    %c0_i32 = arith.constant 0 : i32
    %c0_i32_0 = arith.constant 0 : i32
    %c0_i32_1 = arith.constant 0 : i32
    return %c0_i32, %c0_i32_0 : i32, i32
  }
  func.func @transform_6(%arg0: i32) -> (i32, i32) {
    %c0_i32 = arith.constant 0 : i32
    %c0_i32_0 = arith.constant 0 : i32
    return %arg0, %c0_i32 : i32, i32
  }
}

</mosaic_0001>

<llo_original>
// kernel: tpu_custom_call.1
$region0: #{tpu_custom_call.1}
  #allocation0 [shape = 'u32[]', space=smem, size = 0x4, offset = 0x4, fixed_abs, tag = 'smem constant byte address 0x4 - core index']
  #allocation1 [shape = 'u32[144,128]{1,0:T(1,128)}', space=vmem, size = 0x12000, scoped, tag = 'internal scratch']
  %s0 = inlined_call_operand.hbm [shape: f32[16,16], index: 0, kind: input, shape index: {}]
  %s1 = inlined_call_operand.hbm [shape: f32[16,128], index: 1, kind: input, shape index: {}]
  %s2 = inlined_call_operand.hbm [shape: f32[16,384], index: 2, kind: input, shape index: {}]
  %s3 = inlined_call_operand.hbm [shape: f32[128,384], index: 3, kind: input, shape index: {}]
  %s4 = inlined_call_operand.vmem [shape: f32[1,384], index: 4, kind: input, shape index: {}]
  %s5 = inlined_call_operand.vmem [shape: f32[1,128], index: 5, kind: input, shape index: {}]
  %s6 = inlined_call_operand.hbm [shape: f32[16,128], index: 6, kind: output, shape index: {}]
  %s7 = sld [smem:[#allocation0]]
  $region50: #{tpu_custom_call.1} parent=0
    _
  %s9 = ssub.s32 1, %s7
  %s10 = scalar_select 0, %s9, %s7
  $region1: #{tpu_custom_call.1} parent=0
    #allocation2 [shape = 'u8[8192]{0}', space=vmem, size = 0x2000, scoped, tag = 'input window, operand 0, single buffered']
    #allocation3 [shape = 's32[1]{0}', space=sflag, size = 0x4, scoped, tag = 'scoped memory for tpu_custom_call.1']
    #allocation4 [shape = 's32[1]{0}', space=sflag, size = 0x4, scoped, tag = 'scoped memory for tpu_custom_call.1']
    #allocation5 [shape = 'u8[8192]{0}', space=vmem, size = 0x2000, scoped, tag = 'input window, operand 1, single buffered']
    #allocation6 [shape = 's32[1]{0}', space=sflag, size = 0x4, scoped, tag = 'scoped memory for tpu_custom_call.1']
    #allocation7 [shape = 'u8[24576]{0}', space=vmem, size = 0x6000, scoped, tag = 'input window, operand 2, single buffered']
    #allocation8 [shape = 'u8[196608]{0}', space=vmem, size = 0x30000, scoped, tag = 'input window, operand 3, single buffered']
    #allocation9 [shape = 's32[1]{0}', space=sflag, size = 0x4, scoped, tag = 'scoped memory for tpu_custom_call.1']
    #allocation10 [shape = 'u8[8192]{0}', space=vmem, size = 0x2000, scoped, tag = 'output window, operand 0, single buffered']
    %11 = vsyncpa [#allocation3], 0
    %12 = vsyncpa [#allocation6], 0
    %13 = vsyncpa [#allocation9], 0
    %14 = vsyncpa [#allocation4], 0
    // Predicated region
    $region2: #{tpu_custom_call.1} parent=1 // pred_check
      _
    $region3: #{tpu_custom_call.1} parent=1 // pred_check_branch
      %16 = sbr.rel (0) target = $region5
    $region4: #{tpu_custom_call.1} parent=1 // pred_region
      %s18 = ssub.s32 256, 256
      %19 = vsyncadd [#allocation3], %s18
      %s20 = sshll.u32 [#allocation2], 4
      %s21 = int_to_ptr.vmem [resolvable:$true] %s20
      %26 = dma.hbm_to_vmem [thread:$0]  %s0, 256, %s21, [#allocation3], 128, 128, 8
    $region5: #{tpu_custom_call.1} parent=1 // pred_fallthru
      _
    // Predicated region
    $region6: #{tpu_custom_call.1} parent=1 // pred_check
      _
    $region7: #{tpu_custom_call.1} parent=1 // pred_check_branch
      %28 = sbr.rel (0) target = $region9
    $region8: #{tpu_custom_call.1} parent=1 // pred_region
      %s30 = ssub.s32 256, 256
      %31 = vsyncadd [#allocation6], %s30
      %s32 = sshll.u32 [#allocation5], 4
      %s33 = int_to_ptr.vmem [resolvable:$true] %s32
      %38 = dma.hbm_to_vmem [thread:$0]  %s1, 256, %s33, [#allocation6], 128, 128, 8
    $region9: #{tpu_custom_call.1} parent=1 // pred_fallthru
      _
    // Predicated region
    $region10: #{tpu_custom_call.1} parent=1 // pred_check
      _
    $region11: #{tpu_custom_call.1} parent=1 // pred_check_branch
      %40 = sbr.rel (0) target = $region13
    $region12: #{tpu_custom_call.1} parent=1 // pred_region
      %s42 = ssub.s32 768, 768
      %43 = vsyncadd [#allocation6], %s42
      %s44 = sshll.u32 [#allocation7], 4
      %s45 = int_to_ptr.vmem [resolvable:$true] %s44
      %50 = dma.hbm_to_vmem [thread:$0]  %s2, 768, %s45, [#allocation6], 384, 384, 24
    $region13: #{tpu_custom_call.1} parent=1 // pred_fallthru
      _
    // Predicated region
    $region14: #{tpu_custom_call.1} parent=1 // pred_check
      _
    $region15: #{tpu_custom_call.1} parent=1 // pred_check_branch
      %52 = sbr.rel (0) target = $region17
    $region16: #{tpu_custom_call.1} parent=1 // pred_region
      %s54 = ssub.s32 6144, 6144
      %55 = vsyncadd [#allocation9], %s54
      %s56 = sshll.u32 [#allocation8], 4
      %s57 = int_to_ptr.vmem [resolvable:$true] %s56
      %62 = dma.hbm_to_vmem [thread:$0]  %s3, 6144, %s57, [#allocation9], 384, 384, 24
    $region17: #{tpu_custom_call.1} parent=1 // pred_fallthru
      _
    // Predicated region
    $region18: #{tpu_custom_call.1} parent=1 // pred_check
      _
    $region19: #{tpu_custom_call.1} parent=1 // pred_check_branch
      %64 = sbr.rel (0) target = $region21
    $region20: #{tpu_custom_call.1} parent=1 // pred_region
      _
    $region21: #{tpu_custom_call.1} parent=1 // pred_fallthru
      _
    // Predicated region
    $region22: #{tpu_custom_call.1} parent=1 // pred_check
      _
    $region23: #{tpu_custom_call.1} parent=1 // pred_check_branch
      %66 = sbr.rel (0) target = $region25
    $region24: #{tpu_custom_call.1} parent=1 // pred_region
      _
    $region25: #{tpu_custom_call.1} parent=1 // pred_fallthru
      _
    // Predicated region
    $region26: #{tpu_custom_call.1} parent=1 // pred_check
      _
    $region27: #{tpu_custom_call.1} parent=1 // pred_check_branch
      %68 = sbr.rel (0) target = $region29
    $region28: #{tpu_custom_call.1} parent=1 // pred_region
      %69 = dma.done [#allocation3], 256
    $region29: #{tpu_custom_call.1} parent=1 // pred_fallthru
      _
    // Predicated region
    $region30: #{tpu_custom_call.1} parent=1 // pred_check
      _
    $region31: #{tpu_custom_call.1} parent=1 // pred_check_branch
      %71 = sbr.rel (0) target = $region33
    $region32: #{tpu_custom_call.1} parent=1 // pred_region
      %72 = dma.done [#allocation6], 256
    $region33: #{tpu_custom_call.1} parent=1 // pred_fallthru
      _
    // Predicated region
    $region34: #{tpu_custom_call.1} parent=1 // pred_check
      _
    $region35: #{tpu_custom_call.1} parent=1 // pred_check_branch
      %74 = sbr.rel (0) target = $region37
    $region36: #{tpu_custom_call.1} parent=1 // pred_region
      %75 = dma.done [#allocation6], 768
    $region37: #{tpu_custom_call.1} parent=1 // pred_fallthru
      _
    // Predicated region
    $region38: #{tpu_custom_call.1} parent=1 // pred_check
      _
    $region39: #{tpu_custom_call.1} parent=1 // pred_check_branch
      %77 = sbr.rel (0) target = $region41
    $region40: #{tpu_custom_call.1} parent=1 // pred_region
      %78 = dma.done [#allocation9], 6144
    $region41: #{tpu_custom_call.1} parent=1 // pred_fallthru
      _
    %v79 = vld [vmem:[#allocation2] sm:$0xff]
    %v80 = vld [vmem:[#allocation2 + $0x8] sm:$0xff]
    %v81 = vld [vmem:[#allocation5] sm:$0xff]
    %v82 = vld [vmem:[#allocation5 + $0x8] sm:$0xff]
    %v83 = vld [vmem:[#allocation7] sm:$0xff]
    %v84 = vld [vmem:[#allocation7 + $0x8] sm:$0xff]
    %v85 = vld [vmem:[#allocation7 + $0x10] sm:$0xff]
    %v86 = vld [vmem:[#allocation7 + $0x18] sm:$0xff]
    %v87 = vld [vmem:[#allocation7 + $0x20] sm:$0xff]
    %v88 = vld [vmem:[#allocation7 + $0x28] sm:$0xff]
    %v89 = vld [vmem:[%s4] sm:$0x7]
    %v91 = vlaneseq
    %v92 = vshrl.u32 %v91, 7
    %v93 = vsub.s32 0, %v92
    %v94 = vrot.slane %v89, %v93
    %v95 = vlaneseq
    %v96 = vshrl.u32 %v95, 7
    %v97 = vsub.s32 1, %v96
    %v98 = vrot.slane %v89, %v97
    %v99 = vlaneseq
    %v100 = vshrl.u32 %v99, 7
    %v101 = vsub.s32 2, %v100
    %v102 = vrot.slane %v89, %v101
    %vm106 = vcmask 130048
    %v108 = vsel %vm106, %v79, 0
    %v111 = vsel %vm106, %v80, 0
    %113 = vmatprep.subr.mxu0 0.0
    %114 = vmatpush1.msra.mxu0 0.0
    %115 = vmatprep.subr.mxu0 0.0
    %116 = vmatpush1.msra.mxu0 0.0
    %117 = vmatprep.subr.mxu0 0.0
    %118 = vmatpush1.msra.mxu0 0.0
    %119 = vmatprep.subr.mxu0 0.0
    %120 = vmatpush1.msra.mxu0 0.0
    %121 = vmatprep.subr.mxu0 0.0
    %122 = vmatpush1.msra.mxu0 0.0
    %123 = vmatprep.subr.mxu0 0.0
    %124 = vmatpush1.msra.mxu0 0.0
    %125 = vmatprep.subr.mxu0 0.0
    %126 = vmatpush1.msra.mxu0 0.0
    %127 = vmatprep.subr.mxu0 0.0
    %128 = vmatpush1.msra.mxu0 0.0
    %129 = vmatprep.subr.mxu0 0.0
    %130 = vmatpush1.msra.mxu0 0.0
    %131 = vmatprep.subr.mxu0 0.0
    %132 = vmatpush1.msra.mxu0 0.0
    %133 = vmatprep.subr.mxu0 0.0
    %134 = vmatpush1.msra.mxu0 0.0
    %135 = vmatprep.subr.mxu0 0.0
    %136 = vmatpush1.msra.mxu0 0.0
    %137 = vmatprep.subr.mxu0 0.0
    %138 = vmatpush1.msra.mxu0 0.0
    %139 = vmatprep.subr.mxu0 0.0
    %140 = vmatpush1.msra.mxu0 0.0
    %141 = vmatprep.subr.mxu0 %v87
    %142 = vmatpush1.msra.mxu0 %v86
    %143 = vmatprep.subr.mxu0 %v84
    %144 = vmatpush1.msra.mxu0 %v83
    %145 = vmatprep.subr.mxu0 0.0
    %146 = vmatpush2.msra.mxu0 0.0
    %147 = vmatprep.subr.mxu0 0.0
    %148 = vmatpush2.msra.mxu0 0.0
    %149 = vmatprep.subr.mxu0 0.0
    %150 = vmatpush2.msra.mxu0 0.0
    %151 = vmatprep.subr.mxu0 0.0
    %152 = vmatpush2.msra.mxu0 0.0
    %153 = vmatprep.subr.mxu0 0.0
    %154 = vmatpush2.msra.mxu0 0.0
    %155 = vmatprep.subr.mxu0 0.0
    %156 = vmatpush2.msra.mxu0 0.0
    %157 = vmatprep.subr.mxu0 0.0
    %158 = vmatpush2.msra.mxu0 0.0
    %159 = vmatprep.subr.mxu0 0.0
    %160 = vmatpush2.msra.mxu0 0.0
    %161 = vmatprep.subr.mxu0 0.0
    %162 = vmatpush2.msra.mxu0 0.0
    %163 = vmatprep.subr.mxu0 0.0
    %164 = vmatpush2.msra.mxu0 0.0
    %165 = vmatprep.subr.mxu0 0.0
    %166 = vmatpush2.msra.mxu0 0.0
    %167 = vmatprep.subr.mxu0 0.0
    %168 = vmatpush2.msra.mxu0 0.0
    %169 = vmatprep.subr.mxu0 0.0
    %170 = vmatpush2.msra.mxu0 0.0
    %171 = vmatprep.subr.mxu0 0.0
    %172 = vmatpush2.msra.mxu0 0.0
    %173 = vmatprep.subr.mxu0 0.0
    %174 = vmatpush2.msra.mxu0 0.0
    %175 = vmatprep.subr.mxu0 0.0
    %176 = vmatpush2.msra.mxu0 0.0
    %177 = vmatprep.mubr.f32.mxu0 0.0
    %178 = vmatmul.mubr.f32.gmra.mxu0 %v108
    %v179 = vpop.f32.mrf.mxu0
    %v180 = vadd.f32 %v94, %v179
    %v181 = vpop.f32.mrf.mxu0
    %v182 = vadd.f32 %v98, %v181
    %183 = vmatprep.mubr.f32.mxu0 0.0
    %184 = vmatmul.mubr.f32.gmra.mxu0 %v111
    %v185 = vpop.f32.mrf.mxu0
    %v186 = vadd.f32 %v94, %v185
    %v187 = vpop.f32.mrf.mxu0
    %v188 = vadd.f32 %v98, %v187
    %189 = vdwg.mxu0
    %190 = vmatprep.subr.mxu0 0.0
    %191 = vmatpush1.msra.mxu0 0.0
    %192 = vmatprep.subr.mxu0 0.0
    %193 = vmatpush1.msra.mxu0 0.0
    %194 = vmatprep.subr.mxu0 0.0
    %195 = vmatpush1.msra.mxu0 0.0
    %196 = vmatprep.subr.mxu0 0.0
    %197 = vmatpush1.msra.mxu0 0.0
    %198 = vmatprep.subr.mxu0 0.0
    %199 = vmatpush1.msra.mxu0 0.0
    %200 = vmatprep.subr.mxu0 0.0
    %201 = vmatpush1.msra.mxu0 0.0
    %202 = vmatprep.subr.mxu0 0.0
    %203 = vmatpush1.msra.mxu0 0.0
    %204 = vmatprep.subr.mxu0 0.0
    %205 = vmatpush1.msra.mxu0 0.0
    %206 = vmatprep.subr.mxu0 0.0
    %207 = vmatpush1.msra.mxu0 0.0
    %208 = vmatprep.subr.mxu0 0.0
    %209 = vmatpush1.msra.mxu0 0.0
    %210 = vmatprep.subr.mxu0 0.0
    %211 = vmatpush1.msra.mxu0 0.0
    %212 = vmatprep.subr.mxu0 0.0
    %213 = vmatpush1.msra.mxu0 0.0
    %214 = vmatprep.subr.mxu0 0.0
    %215 = vmatpush1.msra.mxu0 0.0
    %216 = vmatprep.subr.mxu0 0.0
    %217 = vmatpush1.msra.mxu0 0.0
    %218 = vmatprep.subr.mxu0 0.0
    %219 = vmatpush1.msra.mxu0 %v88
    %220 = vmatprep.subr.mxu0 0.0
    %221 = vmatpush1.msra.mxu0 %v85
    %222 = vmatprep.subr.mxu0 0.0
    %223 = vmatpush2.msra.mxu0 0.0
    %224 = vmatprep.subr.mxu0 0.0
    %225 = vmatpush2.msra.mxu0 0.0
    %226 = vmatprep.subr.mxu0 0.0
    %227 = vmatpush2.msra.mxu0 0.0
    %228 = vmatprep.subr.mxu0 0.0
    %229 = vmatpush2.msra.mxu0 0.0
    %230 = vmatprep.subr.mxu0 0.0
    %231 = vmatpush2.msra.mxu0 0.0
    %232 = vmatprep.subr.mxu0 0.0
    %233 = vmatpush2.msra.mxu0 0.0
    %234 = vmatprep.subr.mxu0 0.0
    %235 = vmatpush2.msra.mxu0 0.0
    %236 = vmatprep.subr.mxu0 0.0
    %237 = vmatpush2.msra.mxu0 0.0
    %238 = vmatprep.subr.mxu0 0.0
    %239 = vmatpush2.msra.mxu0 0.0
    %240 = vmatprep.subr.mxu0 0.0
    %241 = vmatpush2.msra.mxu0 0.0
    %242 = vmatprep.subr.mxu0 0.0
    %243 = vmatpush2.msra.mxu0 0.0
    %244 = vmatprep.subr.mxu0 0.0
    %245 = vmatpush2.msra.mxu0 0.0
    %246 = vmatprep.subr.mxu0 0.0
    %247 = vmatpush2.msra.mxu0 0.0
    %248 = vmatprep.subr.mxu0 0.0
    %249 = vmatpush2.msra.mxu0 0.0
    %250 = vmatprep.subr.mxu0 0.0
    %251 = vmatpush2.msra.mxu0 0.0
    %252 = vmatprep.subr.mxu0 0.0
    %253 = vmatpush2.msra.mxu0 0.0
    %254 = vmatprep.mubr.f32.mxu0 0.0
    %255 = vmatmul.mubr.f32.gmra.mxu0 %v108
    %v256 = vpop.f32.mrf.mxu0
    %v257 = vadd.f32 %v102, %v256
    %v258 = vpop.f32.mrf.mxu0
    %259 = vmatprep.mubr.f32.mxu0 0.0
    %260 = vmatmul.mubr.f32.gmra.mxu0 %v111
    %v261 = vpop.f32.mrf.mxu0
    %v262 = vadd.f32 %v102, %v261
    %v263 = vpop.f32.mrf.mxu0
    %264 = vdwg.mxu0
    %v265 = vld [vmem:[#allocation8] sm:$0xff]
    %v266 = vld [vmem:[#allocation8 + $0x8] sm:$0xff]
    %v267 = vld [vmem:[#allocation8 + $0x10] sm:$0xff]
    %v268 = vld [vmem:[#allocation8 + $0x18] sm:$0xff]
    %v269 = vld [vmem:[#allocation8 + $0x20] sm:$0xff]
    %v270 = vld [vmem:[#allocation8 + $0x28] sm:$0xff]
    %v271 = vld [vmem:[#allocation8 + $0x30] sm:$0xff]
    %v272 = vld [vmem:[#allocation8 + $0x38] sm:$0xff]
    %v273 = vld [vmem:[#allocation8 + $0x40] sm:$0xff]
    %v274 = vld [vmem:[#allocation8 + $0x48] sm:$0xff]
    %v275 = vld [vmem:[#allocation8 + $0x50] sm:$0xff]
    %v276 = vld [vmem:[#allocation8 + $0x58] sm:$0xff]
    %v277 = vld [vmem:[#allocation8 + $0x60] sm:$0xff]
    %v278 = vld [vmem:[#allocation8 + $0x68] sm:$0xff]
    %v279 = vld [vmem:[#allocation8 + $0x70] sm:$0xff]
    %v280 = vld [vmem:[#allocation8 + $0x78] sm:$0xff]
    %v281 = vld [vmem:[#allocation8 + $0x80] sm:$0xff]
    %v282 = vld [vmem:[#allocation8 + $0x88] sm:$0xff]
    %v283 = vld [vmem:[#allocation8 + $0x90] sm:$0xff]
    %v284 = vld [vmem:[#allocation8 + $0x98] sm:$0xff]
    %v285 = vld [vmem:[#allocation8 + $0xa0] sm:$0xff]
    %v286 = vld [vmem:[#allocation8 + $0xa8] sm:$0xff]
    %v287 = vld [vmem:[#allocation8 + $0xb0] sm:$0xff]
    %v288 = vld [vmem:[#allocation8 + $0xb8] sm:$0xff]
    %v289 = vld [vmem:[#allocation8 + $0xc0] sm:$0xff]
    %v290 = vld [vmem:[#allocation8 + $0xc8] sm:$0xff]
    %v291 = vld [vmem:[#allocation8 + $0xd0] sm:$0xff]
    %v292 = vld [vmem:[#allocation8 + $0xd8] sm:$0xff]
    %v293 = vld [vmem:[#allocation8 + $0xe0] sm:$0xff]
    %v294 = vld [vmem:[#allocation8 + $0xe8] sm:$0xff]
    %v295 = vld [vmem:[#allocation8 + $0xf0] sm:$0xff]
    %v296 = vld [vmem:[#allocation8 + $0xf8] sm:$0xff]
    %v297 = vld [vmem:[#allocation8 + $0x100] sm:$0xff]
    %v298 = vld [vmem:[#allocation8 + $0x108] sm:$0xff]
    %v299 = vld [vmem:[#allocation8 + $0x110] sm:$0xff]
    %v300 = vld [vmem:[#allocation8 + $0x118] sm:$0xff]
    %v301 = vld [vmem:[#allocation8 + $0x120] sm:$0xff]
    %v302 = vld [vmem:[#allocation8 + $0x128] sm:$0xff]
    %v303 = vld [vmem:[#allocation8 + $0x130] sm:$0xff]
    %v304 = vld [vmem:[#allocation8 + $0x138] sm:$0xff]
    %v305 = vld [vmem:[#allocation8 + $0x140] sm:$0xff]
    %v306 = vld [vmem:[#allocation8 + $0x148] sm:$0xff]
    %v307 = vld [vmem:[#allocation8 + $0x150] sm:$0xff]
    %v308 = vld [vmem:[#allocation8 + $0x158] sm:$0xff]
    %v309 = vld [vmem:[#allocation8 + $0x160] sm:$0xff]
    %v310 = vld [vmem:[#allocation8 + $0x168] sm:$0xff]
    %v311 = vld [vmem:[#allocation8 + $0x170] sm:$0xff]
    %v312 = vld [vmem:[#allocation8 + $0x178] sm:$0xff]
    %313 = vmatprep.subr.mxu0 %v311
    %314 = vmatpush1.msra.mxu0 %v310
    %315 = vmatprep.subr.mxu0 %v308
    %316 = vmatpush1.msra.mxu0 %v307
    %317 = vmatprep.subr.mxu0 %v305
    %318 = vmatpush1.msra.mxu0 %v304
    %319 = vmatprep.subr.mxu0 %v302
    %320 = vmatpush1.msra.mxu0 %v301
    %321 = vmatprep.subr.mxu0 %v299
    %322 = vmatpush1.msra.mxu0 %v298
    %323 = vmatprep.subr.mxu0 %v296
    %324 = vmatpush1.msra.mxu0 %v295
    %325 = vmatprep.subr.mxu0 %v293
    %326 = vmatpush1.msra.mxu0 %v292
    %327 = vmatprep.subr.mxu0 %v290
    %328 = vmatpush1.msra.mxu0 %v289
    %329 = vmatprep.subr.mxu0 %v287
    %330 = vmatpush1.msra.mxu0 %v286
    %331 = vmatprep.subr.mxu0 %v284
    %332 = vmatpush1.msra.mxu0 %v283
    %333 = vmatprep.subr.mxu0 %v281
    %334 = vmatpush1.msra.mxu0 %v280
    %335 = vmatprep.subr.mxu0 %v278
    %336 = vmatpush1.msra.mxu0 %v277
    %337 = vmatprep.subr.mxu0 %v275
    %338 = vmatpush1.msra.mxu0 %v274
    %339 = vmatprep.subr.mxu0 %v272
    %340 = vmatpush1.msra.mxu0 %v271
    %341 = vmatprep.subr.mxu0 %v269
    %342 = vmatpush1.msra.mxu0 %v268
    %343 = vmatprep.subr.mxu0 %v266
    %344 = vmatpush1.msra.mxu0 %v265
    %345 = vmatprep.subr.mxu0 0.0
    %346 = vmatpush2.msra.mxu0 0.0
    %347 = vmatprep.subr.mxu0 0.0
    %348 = vmatpush2.msra.mxu0 0.0
    %349 = vmatprep.subr.mxu0 0.0
    %350 = vmatpush2.msra.mxu0 0.0
    %351 = vmatprep.subr.mxu0 0.0
    %352 = vmatpush2.msra.mxu0 0.0
    %353 = vmatprep.subr.mxu0 0.0
    %354 = vmatpush2.msra.mxu0 0.0
    %355 = vmatprep.subr.mxu0 0.0
    %356 = vmatpush2.msra.mxu0 0.0
    %357 = vmatprep.subr.mxu0 0.0
    %358 = vmatpush2.msra.mxu0 0.0
    %359 = vmatprep.subr.mxu0 0.0
    %360 = vmatpush2.msra.mxu0 0.0
    %361 = vmatprep.subr.mxu0 0.0
    %362 = vmatpush2.msra.mxu0 0.0
    %363 = vmatprep.subr.mxu0 0.0
    %364 = vmatpush2.msra.mxu0 0.0
    %365 = vmatprep.subr.mxu0 0.0
    %366 = vmatpush2.msra.mxu0 0.0
    %367 = vmatprep.subr.mxu0 0.0
    %368 = vmatpush2.msra.mxu0 0.0
    %369 = vmatprep.subr.mxu0 0.0
    %370 = vmatpush2.msra.mxu0 0.0
    %371 = vmatprep.subr.mxu0 0.0
    %372 = vmatpush2.msra.mxu0 0.0
    %373 = vmatprep.subr.mxu0 0.0
    %374 = vmatpush2.msra.mxu0 0.0
    %375 = vmatprep.subr.mxu0 0.0
    %376 = vmatpush2.msra.mxu0 0.0
    %377 = vmatprep.mubr.f32.mxu0 0.0
    %378 = vmatmul.mubr.f32.gmra.mxu0 %v81
    %v379 = vpop.f32.mrf.mxu0
    %v380 = vadd.f32 0.0, %v379
    %v381 = vpop.f32.mrf.mxu0
    %v382 = vadd.f32 0.0, %v381
    %383 = vmatprep.mubr.f32.mxu0 0.0
    %384 = vmatmul.mubr.f32.gmra.mxu0 %v82
    %v385 = vpop.f32.mrf.mxu0
    %v386 = vadd.f32 0.0, %v385
    %v387 = vpop.f32.mrf.mxu0
    %v388 = vadd.f32 0.0, %v387
    %389 = vdwg.mxu0
    %390 = vmatprep.subr.mxu0 0.0
    %391 = vmatpush1.msra.mxu0 %v312
    %392 = vmatprep.subr.mxu0 0.0
    %393 = vmatpush1.msra.mxu0 %v309
    %394 = vmatprep.subr.mxu0 0.0
    %395 = vmatpush1.msra.mxu0 %v306
    %396 = vmatprep.subr.mxu0 0.0
    %397 = vmatpush1.msra.mxu0 %v303
    %398 = vmatprep.subr.mxu0 0.0
    %399 = vmatpush1.msra.mxu0 %v300
    %400 = vmatprep.subr.mxu0 0.0
    %401 = vmatpush1.msra.mxu0 %v297
    %402 = vmatprep.subr.mxu0 0.0
    %403 = vmatpush1.msra.mxu0 %v294
    %404 = vmatprep.subr.mxu0 0.0
    %405 = vmatpush1.msra.mxu0 %v291
    %406 = vmatprep.subr.mxu0 0.0
    %407 = vmatpush1.msra.mxu0 %v288
    %408 = vmatprep.subr.mxu0 0.0
    %409 = vmatpush1.msra.mxu0 %v285
    %410 = vmatprep.subr.mxu0 0.0
    %411 = vmatpush1.msra.mxu0 %v282
    %412 = vmatprep.subr.mxu0 0.0
    %413 = vmatpush1.msra.mxu0 %v279
    %414 = vmatprep.subr.mxu0 0.0
    %415 = vmatpush1.msra.mxu0 %v276
    %416 = vmatprep.subr.mxu0 0.0
    %417 = vmatpush1.msra.mxu0 %v273
    %418 = vmatprep.subr.mxu0 0.0
    %419 = vmatpush1.msra.mxu0 %v270
    %420 = vmatprep.subr.mxu0 0.0
    %421 = vmatpush1.msra.mxu0 %v267
    %422 = vmatprep.subr.mxu0 0.0
    %423 = vmatpush2.msra.mxu0 0.0
    %424 = vmatprep.subr.mxu0 0.0
    %425 = vmatpush2.msra.mxu0 0.0
    %426 = vmatprep.subr.mxu0 0.0
    %427 = vmatpush2.msra.mxu0 0.0
    %428 = vmatprep.subr.mxu0 0.0
    %429 = vmatpush2.msra.mxu0 0.0
    %430 = vmatprep.subr.mxu0 0.0
    %431 = vmatpush2.msra.mxu0 0.0
    %432 = vmatprep.subr.mxu0 0.0
    %433 = vmatpush2.msra.mxu0 0.0
    %434 = vmatprep.subr.mxu0 0.0
    %435 = vmatpush2.msra.mxu0 0.0
    %436 = vmatprep.subr.mxu0 0.0
    %437 = vmatpush2.msra.mxu0 0.0
    %438 = vmatprep.subr.mxu0 0.0
    %439 = vmatpush2.msra.mxu0 0.0
    %440 = vmatprep.subr.mxu0 0.0
    %441 = vmatpush2.msra.mxu0 0.0
    %442 = vmatprep.subr.mxu0 0.0
    %443 = vmatpush2.msra.mxu0 0.0
    %444 = vmatprep.subr.mxu0 0.0
    %445 = vmatpush2.msra.mxu0 0.0
    %446 = vmatprep.subr.mxu0 0.0
    %447 = vmatpush2.msra.mxu0 0.0
    %448 = vmatprep.subr.mxu0 0.0
    %449 = vmatpush2.msra.mxu0 0.0
    %450 = vmatprep.subr.mxu0 0.0
    %451 = vmatpush2.msra.mxu0 0.0
    %452 = vmatprep.subr.mxu0 0.0
    %453 = vmatpush2.msra.mxu0 0.0
    %454 = vmatprep.mubr.f32.mxu0 0.0
    %455 = vmatmul.mubr.f32.gmra.mxu0 %v81
    %v456 = vpop.f32.mrf.mxu0
    %v457 = vadd.f32 0.0, %v456
    %v458 = vpop.f32.mrf.mxu0
    %459 = vmatprep.mubr.f32.mxu0 0.0
    %460 = vmatmul.mubr.f32.gmra.mxu0 %v82
    %v461 = vpop.f32.mrf.mxu0
    %v462 = vadd.f32 0.0, %v461
    %v463 = vpop.f32.mrf.mxu0
    %464 = vdwg.mxu0
    %v465 = vadd.f32 %v180, %v380
    %v466 = vadd.f32 %v186, %v386
    %v467 = vxor.u32 %v465, 2147483648
    %v468 = vxor.u32 %v466, 2147483648
    %v469 = vmul.f32 %v467, 1.442695
    %v470 = vpow.pop %v469
    %v471 = vmul.f32 %v468, 1.442695
    %v472 = vpow.pop %v471
    %v473 = vadd.f32 %v470, 1.0
    %v474 = vadd.f32 %v472, 1.0
    %v475 = vrcp.pop %v473
    %v476 = vmul.f32 1.0, %v475
    %v477 = vrcp.pop %v474
    %v478 = vmul.f32 1.0, %v477
    %v479 = vadd.f32 %v182, %v382
    %v480 = vadd.f32 %v188, %v388
    %v481 = vxor.u32 %v479, 2147483648
    %v482 = vxor.u32 %v480, 2147483648
    %v483 = vmul.f32 %v481, 1.442695
    %v484 = vpow.pop %v483
    %v485 = vmul.f32 %v482, 1.442695
    %v486 = vpow.pop %v485
    %v487 = vadd.f32 %v484, 1.0
    %v488 = vadd.f32 %v486, 1.0
    %v489 = vrcp.pop %v487
    %v490 = vmul.f32 1.0, %v489
    %v491 = vrcp.pop %v488
    %v492 = vmul.f32 1.0, %v491
    %v493 = vld [vmem:[%s5] sm:$0x1]
    %v495 = vlaneseq
    %v496 = vshrl.u32 %v495, 7
    %v497 = vsub.s32 0, %v496
    %v498 = vrot.slane %v493, %v497
    %v500 = vadd.f32 %v457, %v498
    %v501 = vadd.f32 %v462, %v498
    %v502 = vmul.f32 %v476, %v500
    %v503 = vmul.f32 %v478, %v501
    %v504 = vadd.f32 %v257, %v502
    %v505 = vadd.f32 %v262, %v503
    %v506 = vtanh.pop %v504
    %v507 = vtanh.pop %v505
    %v508 = vsub.f32 %v81, %v506
    %v509 = vsub.f32 %v82, %v507
    %v510 = vmul.f32 %v490, %v508
    %v511 = vmul.f32 %v492, %v509
    %v512 = vadd.f32 %v506, %v510
    %v513 = vadd.f32 %v507, %v511
    %514 = vst [vmem:[#allocation10] sm:$0xff] %v512
    %515 = vst [vmem:[#allocation10 + $0x8] sm:$0xff] %v513
    // Predicated region
    $region42: #{tpu_custom_call.1} parent=1 // pred_check
      _
    $region43: #{tpu_custom_call.1} parent=1 // pred_check_branch
      %517 = sbr.rel (0) target = $region45
    $region44: #{tpu_custom_call.1} parent=1 // pred_region
      %s519 = ssub.s32 256, 256
      %520 = vsyncadd [#allocation4], %s519
      %s521 = sshll.u32 [#allocation10], 4
      %s522 = int_to_ptr.vmem [resolvable:$true] %s521
      %527 = dma.vmem_to_hbm [thread:$0]  %s522, 256, %s6, [#allocation4], 128, 128, 8
    $region45: #{tpu_custom_call.1} parent=1 // pred_fallthru
      _
    // Predicated region
    $region46: #{tpu_custom_call.1} parent=1 // pred_check
      _
    $region47: #{tpu_custom_call.1} parent=1 // pred_check_branch
      %529 = sbr.rel (0) target = $region49
    $region48: #{tpu_custom_call.1} parent=1 // pred_region
      %530 = dma.done [#allocation4], 256
    $region49: #{tpu_custom_call.1} parent=1 // pred_fallthru
      _
    %531 = vsyncpa [#allocation3], 1
    %532 = vsyncpa [#allocation6], 1
    %533 = vsyncpa [#allocation9], 1
    %534 = vsyncpa [#allocation4], 1

</llo_original>
